<compile_context>
chip_gen: v7x
topology: tpu7x:2x2x1
jax: 0.10.0
libtpu: 0.0.40
codegen_flags: <defaults>
</compile_context>

<pallas_src>
import jax
import jax.numpy as jnp
from jax.experimental import pallas as pl
from jax.experimental.pallas import tpu as pltpu


def _pos_embed_kernel(col_ref, row_ref, out_ref):
    """col_ref: (F, 1, W)   = col_embed.weight[:W].T, feature-major, broadcast over rows.
    row_ref: (F, tH, 1)  = row_embed.weight[h-tile].T, feature-major, broadcast over cols.
    out_ref: (F, tH, W)  one half (x-half or y-half) of the channel-first position map."""
    F, tH, W = out_ref.shape
    half = pl.program_id(0)  # 0 -> x/col half (channels [0, F)); 1 -> y/row half ([F, 2F))

    @pl.when(half == 0)
    def _():
        # Value depends only on w: sublane broadcast of the (F, 1, W) slab over tH rows.
        out_ref[...] = jnp.broadcast_to(col_ref[...], (F, tH, W)).astype(out_ref.dtype)

    @pl.when(half == 1)
    def _():
        # Value depends only on h: lane broadcast of the (F, tH, 1) slab over W columns.
        out_ref[...] = jnp.broadcast_to(row_ref[...], (F, tH, W)).astype(out_ref.dtype)


def _pick_row_tile(h):
    """Row-tile size: full H when small, else a multiple-of-8 divisor (keeps blocks within
    VMEM budgets, incl. v7x's 64 MiB, at production feature-map sizes)."""
    if h <= 128:
        return h
    for cand in (128, 64, 32, 16, 8):
        if h % cand == 0:
            return cand
    return h  # odd H: fall back to the full dim (allowed by the full-dims exception)


def position_embedding_learned(x, col_weight, row_weight, *, out_dtype=None):
    """x: (B, C, H, W) NCHW (only shape used).  col_weight/row_weight: (50, F) tables.
    Returns (B, 2F, H, W), matching PyTorch PositionEmbeddingLearned.forward."""
    B, _, H, W = x.shape
    n_pos, F = col_weight.shape
    if row_weight.shape != (n_pos, F):
        raise ValueError(f"row/col embedding shape mismatch: {row_weight.shape} vs {col_weight.shape}")
    if H > n_pos or W > n_pos:
        raise ValueError(f"H={H}, W={W} exceed embedding table size {n_pos}")
    out_dtype = col_weight.dtype if out_dtype is None else out_dtype

    # Tiny layout plumbing on the (<=50, F) tables so the kernel only does size-1-dim
    # broadcasts (no in-kernel transpose/relayout). A few KiB of wrapper work.
    col_t = jnp.transpose(col_weight[:W])[:, None, :]   # (F, 1, W)
    row_t = jnp.transpose(row_weight[:H])[:, :, None]   # (F, H, 1)

    tH = _pick_row_tile(H)
    grid = (2, pl.cdiv(H, tH))  # axis 0: x-half / y-half, axis 1: row tiles — both parallel

    pos = pl.pallas_call(
        _pos_embed_kernel,
        out_shape=jax.ShapeDtypeStruct((2 * F, H, W), out_dtype),
        grid=grid,
        in_specs=[
            pl.BlockSpec((F, 1, W), lambda i, h: (0, 0, 0)),   # col table (resident)
            pl.BlockSpec((F, tH, 1), lambda i, h: (0, h, 0)),  # row-tile of row table
        ],
        out_specs=pl.BlockSpec((F, tH, W), lambda i, h: (i, h, 0)),
        compiler_params=pltpu.CompilerParams(
            dimension_semantics=("parallel", "parallel")),
    )(col_t, row_t)

    # Batch "repeat": broadcast instead of materializing B identical copies in the kernel.
    return jnp.broadcast_to(pos[None], (B, 2 * F, H, W))


if __name__ == "__main__":
    # Small, deterministic setup consistent with the module.
    B, C, H, W = 2, 4, 16, 16
    num_pos_feats = 32  # module default is 256; kept small here

    key = jax.random.PRNGKey(0)
    k_row, k_col, k_x = jax.random.split(key, 3)

    # nn.init.uniform_ -> U[0, 1) on (50, num_pos_feats) embedding tables.
    row_weight = jax.random.uniform(k_row, (50, num_pos_feats), dtype=jnp.float32)
    col_weight = jax.random.uniform(k_col, (50, num_pos_feats), dtype=jnp.float32)

    # Input tensor (values unused, only shape matters).
    x = jax.random.normal(k_x, (B, C, H, W), dtype=jnp.float32)

    pos = position_embedding_learned(x, col_weight, row_weight)
    pos = jax.block_until_ready(pos)

    # Pure-JAX reference (mirrors the PyTorch forward).
    x_emb = col_weight[:W]                       # (W, F)
    y_emb = row_weight[:H]                       # (H, F)
    pos_hw = jnp.concatenate(
        [
            jnp.broadcast_to(x_emb[None, :, :], (H, W, num_pos_feats)),
            jnp.broadcast_to(y_emb[:, None, :], (H, W, num_pos_feats)),
        ],
        axis=-1,
    )                                            # (H, W, 2F)
    ref = jnp.broadcast_to(
        jnp.transpose(pos_hw, (2, 0, 1))[None], (B, 2 * num_pos_feats, H, W)
    )

    assert pos.shape == (B, 2 * num_pos_feats, H, W), pos.shape
    assert pos.dtype == jnp.float32
    assert jnp.allclose(pos, ref), "mismatch vs reference"

    # Optional reduced-precision output path (halves store bytes; useful on v5e).
    pos_bf16 = jax.block_until_ready(
        position_embedding_learned(x, col_weight, row_weight, out_dtype=jnp.bfloat16)
    )
    assert pos_bf16.dtype == jnp.bfloat16
    assert jnp.allclose(pos_bf16.astype(jnp.float32), ref, atol=1e-2, rtol=1e-2)

    print("KERNEL_OK")
</pallas_src>

<mosaic_0001>
module attributes {stable_mosaic.version = 11 : i64} {
  func.func @_pos_embed_kernel(%arg0: i32, %arg1: i32, %arg2: memref<32x1x16xf32, #tpu.memory_space<vmem>>, %arg3: memref<32x16x1xf32, #tpu.memory_space<vmem>>, %arg4: memref<32x16x16xf32, #tpu.memory_space<vmem>>) attributes {dimension_semantics = [#tpu.dimension_semantics<parallel>, #tpu.dimension_semantics<parallel>], iteration_bounds = array<i64: 2, 1>, scalar_prefetch = 0 : i64, scratch_operands = 0 : i64, tpu.core_type = #tpu.core_type<tc>, window_params = [{pipeline_mode = #tpu.pipeline_mode<synchronous>, transform_indices = @transform_0, window_bounds = array<i64: 32, 1, 16>}, {transform_indices = @transform_1, window_bounds = array<i64: 32, 16, 1>}, {transform_indices = @transform_2, window_bounds = array<i64: 32, 16, 16>}]} {
    %c0_i32 = arith.constant 0 : i32
    %0 = arith.cmpi eq, %arg0, %c0_i32 : i32
    %1 = arith.extui %0 : i1 to i32
    %c0_i32_0 = arith.constant 0 : i32
    %2 = arith.cmpi ne, %1, %c0_i32_0 : i32
    scf.if %2 {
      %c0 = arith.constant 0 : index
      %c0_2 = arith.constant 0 : index
      %c0_3 = arith.constant 0 : index
      %6 = vector.load %arg2[%c0, %c0_2, %c0_3] : memref<32x1x16xf32, #tpu.memory_space<vmem>>, vector<32x1x16xf32>
      %7 = vector.shape_cast %6 : vector<32x1x16xf32> to vector<32x1x16xf32>
      %8 = vector.broadcast %7 : vector<32x1x16xf32> to vector<32x16x16xf32>
      %c0_4 = arith.constant 0 : index
      %c0_5 = arith.constant 0 : index
      %c0_6 = arith.constant 0 : index
      %9 = vector.load %arg4[%c0_4, %c0_5, %c0_6] : memref<32x16x16xf32, #tpu.memory_space<vmem>>, vector<32x16x16xf32>
      tpu.vector_store %arg4[%c0_4, %c0_5, %c0_6], %8 {strides = array<i32>} : memref<32x16x16xf32, #tpu.memory_space<vmem>>, vector<32x16x16xf32>,
    } else {
    }
    %c1_i32 = arith.constant 1 : i32
    %3 = arith.cmpi eq, %arg0, %c1_i32 : i32
    %4 = arith.extui %3 : i1 to i32
    %c0_i32_1 = arith.constant 0 : i32
    %5 = arith.cmpi ne, %4, %c0_i32_1 : i32
    scf.if %5 {
      %c0 = arith.constant 0 : index
      %c0_2 = arith.constant 0 : index
      %c0_3 = arith.constant 0 : index
      %6 = vector.load %arg3[%c0, %c0_2, %c0_3] : memref<32x16x1xf32, #tpu.memory_space<vmem>>, vector<32x16x1xf32>
      %7 = vector.shape_cast %6 : vector<32x16x1xf32> to vector<32x16x1xf32>
      %8 = vector.broadcast %7 : vector<32x16x1xf32> to vector<32x16x16xf32>
      %c0_4 = arith.constant 0 : index
      %c0_5 = arith.constant 0 : index
      %c0_6 = arith.constant 0 : index
      %9 = vector.load %arg4[%c0_4, %c0_5, %c0_6] : memref<32x16x16xf32, #tpu.memory_space<vmem>>, vector<32x16x16xf32>
      tpu.vector_store %arg4[%c0_4, %c0_5, %c0_6], %8 {strides = array<i32>} : memref<32x16x16xf32, #tpu.memory_space<vmem>>, vector<32x16x16xf32>,
    } else {
    }
    return
  }
  func.func @transform_0(%arg0: i32, %arg1: i32) -> (i32, i32, i32) {
    %c0_i32 = arith.constant 0 : i32
    %c0_i32_0 = arith.constant 0 : i32
    %c0_i32_1 = arith.constant 0 : i32
    %c0_i32_2 = arith.constant 0 : i32
    return %c0_i32, %c0_i32_0, %c0_i32_1 : i32, i32, i32
  }
  func.func @transform_1(%arg0: i32, %arg1: i32) -> (i32, i32, i32) {
    %c0_i32 = arith.constant 0 : i32
    %c0_i32_0 = arith.constant 0 : i32
    %c0_i32_1 = arith.constant 0 : i32
    return %c0_i32, %arg1, %c0_i32_0 : i32, i32, i32
  }
  func.func @transform_2(%arg0: i32, %arg1: i32) -> (i32, i32, i32) {
    %c0_i32 = arith.constant 0 : i32
    %c0_i32_0 = arith.constant 0 : i32
    return %arg0, %arg1, %c0_i32 : i32, i32, i32
  }
}

</mosaic_0001>

<llo_original>
// kernel: tpu_custom_call.1
$region0: #{tpu_custom_call.1}
  #allocation0 [shape = 'u32[]', space=smem, size = 0x4, offset = 0x4, fixed_abs, tag = 'smem constant byte address 0x4 - core index']
  #allocation1 [shape = 'u32[144,128]{1,0:T(1,128)}', space=vmem, size = 0x12000, scoped, tag = 'internal scratch']
  %s0 = inlined_call_operand.vmem [shape: f32[32,1,16], index: 0, kind: input, shape index: {}]
  %s1 = inlined_call_operand.vmem [shape: f32[32,16,1], index: 1, kind: input, shape index: {}]
  %s2 = inlined_call_operand.vmem [shape: f32[64,16,16], index: 2, kind: output, shape index: {}]
  %s3 = sld [smem:[#allocation0]]
  $region49: #{tpu_custom_call.1} parent=0
    _
  %s5 = ssub.s32 1, %s3
  %s6 = scalar_select 0, %s5, %s3
  loop: start=0, step=1, limit=4
  $region2: #{tpu_custom_call.1} parent=0 // loop_pre_header
    _
  $region3: #{tpu_custom_call.1} parent=0 // loop_header
    %s8 = sphi 0, %s12
    %p9 = scmp.ge.s32.totalorder %s8, 4
    %s15 = sphi 0, %s27
    %s16 = sphi 0, %s23
    %s17 = sphi 0, %s15
    %s18 = sphi 0, %s16
    %s19 = sphi 0, %s17
    %s20 = sphi 0, %s18
    %s28 = sphi 0, %s28
    %s30 = sphi 0, %s28
    %s31 = sphi 0, %s30
    %s45 = sphi 0, %s31
    %s51 = sphi 0, %s53
    %s54 = sphi 0, %s51
    %s55 = sphi 0, %s54
    %s71 = sphi 0, %s55
    %s79 = sphi 0, %s81
    %s82 = sphi 0, %s79
    %s83 = sphi 0, %s82
    %s99 = sphi 0, %s83
  $region4: #{tpu_custom_call.1} parent=0 // loop_header_branch
    %11 = sbr.rel (%p9) target = $region8
  $region5: #{tpu_custom_call.1} parent=0 // loop_body
    %s13 = ssub.s32 %s8, 1
    %s14 = ssub.s32 %s8, 2
    %s21 = sadd.s32 1, %s16
    %p22 = scmp.ge.s32.totalorder %s21, 1
    %s23 = scalar_select %p22, 0, %s21
    %s24 = sadd.s32 1, %s15
    %s25 = scalar_select %p22, %s24, %s15
    %p26 = scmp.ge.s32.totalorder %s25, 2
    %s27 = scalar_select %p26, 0, %s25
    %s29 = sadd.s32 %s28, 1
    %p32 = scmp.eq.s32.totalorder %s8, 1
    %p33 = scmp.ne.s32.totalorder %s28, %s30
    %p34 = scmp.eq.s32.totalorder %s8, 0
    %p35 = por %p33, %p34
    %p36 = scmp.ne.s32.totalorder %s28, %s30
    %p37 = scmp.eq.s32.totalorder %s13, 1
    %p38 = por %p36, %p37
    %p39 = scmp.ne.s32.totalorder %s30, %s31
    %p40 = scmp.eq.s32.totalorder %s13, 0
    %p41 = por %p39, %p40
    %p42 = scmp.ne.s32.totalorder %s30, %s31
    %p43 = scmp.eq.s32.totalorder %s14, 1
    %p44 = por %p42, %p43
    %p46 = scmp.ne.s32.totalorder %s31, %s45
    %p47 = scmp.eq.s32.totalorder %s14, 0
    %p48 = por %p46, %p47
    %s49 = ssub.s32 %s16, %s23
    %p50 = scmp.eq.s32.totalorder %s49, 0
    %s52 = sadd.s32 %s51, 1
    %s53 = scalar_select %p50, %s51, %s52
    %p56 = pneg %p50
    %p57 = scmp.eq.s32.totalorder %s8, 1
    %p58 = por %p56, %p57
    %p59 = scmp.ne.s32.totalorder %s51, %s54
    %p60 = scmp.eq.s32.totalorder %s8, 0
    %p61 = por %p59, %p60
    %p62 = scmp.ne.s32.totalorder %s51, %s54
    %p63 = scmp.eq.s32.totalorder %s13, 1
    %p64 = por %p62, %p63
    %p65 = scmp.ne.s32.totalorder %s54, %s55
    %p66 = scmp.eq.s32.totalorder %s13, 0
    %p67 = por %p65, %p66
    %p68 = scmp.ne.s32.totalorder %s54, %s55
    %p69 = scmp.eq.s32.totalorder %s14, 1
    %p70 = por %p68, %p69
    %p72 = scmp.ne.s32.totalorder %s55, %s71
    %p73 = scmp.eq.s32.totalorder %s14, 0
    %p74 = por %p72, %p73
    %s75 = ssub.s32 %s15, %s27
    %s76 = ssub.s32 %s16, %s23
    %s77 = sor.u32 %s75, %s76
    %p78 = scmp.eq.s32.totalorder %s77, 0
    %s80 = sadd.s32 %s79, 1
    %s81 = scalar_select %p78, %s79, %s80
    %p84 = pneg %p78
    %p85 = scmp.eq.s32.totalorder %s8, 1
    %p86 = por %p84, %p85
    %p87 = scmp.ne.s32.totalorder %s79, %s82
    %p88 = scmp.eq.s32.totalorder %s8, 0
    %p89 = por %p87, %p88
    %p90 = scmp.ne.s32.totalorder %s79, %s82
    %p91 = scmp.eq.s32.totalorder %s13, 1
    %p92 = por %p90, %p91
    %p93 = scmp.ne.s32.totalorder %s82, %s83
    %p94 = scmp.eq.s32.totalorder %s13, 0
    %p95 = por %p93, %p94
    %p96 = scmp.ne.s32.totalorder %s82, %s83
    %p97 = scmp.eq.s32.totalorder %s14, 1
    %p98 = por %p96, %p97
    %p100 = scmp.ne.s32.totalorder %s83, %s99
    %p101 = scmp.eq.s32.totalorder %s14, 0
    %p102 = por %p100, %p101
    %p103 = scmp.le.s32.totalorder 1, %s8
    %p104 = scmp.lt.s32.totalorder %s8, 3
    %p105 = pnand %p103, %p104
    %p106 = pneg %p105
    // Predicated region
    $region9: #{tpu_custom_call.1} parent=5 // pred_check
      _
    $region10: #{tpu_custom_call.1} parent=5 // pred_check_branch
      %108 = sbr.rel (%p105) target = $region12
    $region11: #{tpu_custom_call.1} parent=5 // pred_region
      %s109 = ssub.s32 %s8, 1
      // Predicated region
      $region13: #{tpu_custom_call.1} parent=11 // pred_check
        %p110 = pneg %p41
      $region14: #{tpu_custom_call.1} parent=11 // pred_check_branch
        %112 = sbr.rel (%p110) target = $region16
      $region15: #{tpu_custom_call.1} parent=11 // pred_region
        _
      $region16: #{tpu_custom_call.1} parent=11 // pred_fallthru
        _
      // Predicated region
      $region17: #{tpu_custom_call.1} parent=11 // pred_check
        %p113 = pneg %p67
      $region18: #{tpu_custom_call.1} parent=11 // pred_check_branch
        %115 = sbr.rel (%p113) target = $region20
      $region19: #{tpu_custom_call.1} parent=11 // pred_region
        %s116 = smul.u32 2, %s18
        %p117 = scmp.lt.s32.totalorder %s116, 1
        %s118 = scalar_select %p117, %s116, 1
        %s119 = smul.addr %s118, 8
        %s120 = scalar_lea.vmem %s1, %s119
        %s121 = smul.u32 2, %s18
      $region20: #{tpu_custom_call.1} parent=11 // pred_fallthru
        _
    $region12: #{tpu_custom_call.1} parent=5 // pred_fallthru
      _
    %p122 = scmp.lt.s32.totalorder %s8, 2
    // Predicated region
    $region21: #{tpu_custom_call.1} parent=5 // pred_check
      %p123 = pneg %p122
    $region22: #{tpu_custom_call.1} parent=5 // pred_check_branch
      %125 = sbr.rel (%p123) target = $region24
    $region23: #{tpu_custom_call.1} parent=5 // pred_region
      _
    $region24: #{tpu_custom_call.1} parent=5 // pred_fallthru
      _
    %p126 = scmp.le.s32.totalorder 1, %s8
    %p127 = scmp.lt.s32.totalorder %s8, 3
    %p128 = pnand %p126, %p127
    %p129 = pneg %p128
    // Predicated region
    $region25: #{tpu_custom_call.1} parent=5 // pred_check
      _
    $region26: #{tpu_custom_call.1} parent=5 // pred_check_branch
      %131 = sbr.rel (%p128) target = $region28
    $region27: #{tpu_custom_call.1} parent=5 // pred_region
      %s132 = ssub.s32 %s8, 1
      %p133 = pneg %p41
      %p134 = pneg %p38
      %s135 = smul.u32 2, %s18
      %p136 = scmp.lt.s32.totalorder %s135, 1
      %s137 = scalar_select %p136, %s135, 1
      %s138 = smul.addr %s137, 8
      %s139 = scalar_lea.vmem %s1, %s138
      %p140 = pneg %p67
      %p141 = pneg %p64
      %p142 = pneg %p95
      %p143 = pneg %p92
      %s144 = smul.u32 32, %s17
      %s145 = smul.u32 2, %s18
      %p146 = scmp.lt.s32.totalorder %s144, 63
      %s147 = scalar_select %p146, %s144, 63
      %p148 = scmp.lt.s32.totalorder %s145, 1
      %s149 = scalar_select %p148, %s145, 1
      %s150 = smul.addr %s147, 2
      %s151 = sadd.s32 %s149, %s150
      %s152 = smul.addr %s151, 8
      %s153 = scalar_lea.vmem %s2, %s152
      %s154 = smul.u32 2, %s18
      %p155 = scmp.lt.s32.totalorder %s154, 1
      %s156 = scalar_select %p155, %s154, 1
      %s157 = smul.addr %s156, 8
      %s158 = scalar_lea.vmem %s1, %s157
      %s159 = smul.u32 2, %s18
      %s160 = smul.u32 32, %s17
      %s161 = smul.u32 2, %s18
      %p162 = scmp.lt.s32.totalorder %s160, 63
      %s163 = scalar_select %p162, %s160, 63
      %p164 = scmp.lt.s32.totalorder %s161, 1
      %s165 = scalar_select %p164, %s161, 1
      %s166 = smul.addr %s163, 2
      %s167 = sadd.s32 %s165, %s166
      %s168 = smul.addr %s167, 8
      %s169 = scalar_lea.vmem %s2, %s168
      %s170 = smul.u32 32, %s17
      %s171 = smul.u32 2, %s18
      %p172 = scmp.eq.s32.totalorder %s17, 0
      // Predicated region
      $region29: #{tpu_custom_call.1} parent=27 // pred_check
        %p173 = pneg %p172
      $region30: #{tpu_custom_call.1} parent=27 // pred_check_branch
        %175 = sbr.rel (%p173) target = $region32
      $region31: #{tpu_custom_call.1} parent=27 // pred_region
        %v176 = vld [vmem:[%s0] sm:$0x1]
        %v177 = vld [vmem:[%s0 + $0x1] sm:$0x1]
        %v178 = vld [vmem:[%s0 + $0x2] sm:$0x1]
        %v179 = vld [vmem:[%s0 + $0x3] sm:$0x1]
        %v180 = vld [vmem:[%s0 + $0x4] sm:$0x1]
        %v181 = vld [vmem:[%s0 + $0x5] sm:$0x1]
        %v182 = vld [vmem:[%s0 + $0x6] sm:$0x1]
        %v183 = vld [vmem:[%s0 + $0x7] sm:$0x1]
        %v184 = vld [vmem:[%s0 + $0x8] sm:$0x1]
        %v185 = vld [vmem:[%s0 + $0x9] sm:$0x1]
        %v186 = vld [vmem:[%s0 + $0xa] sm:$0x1]
        %v187 = vld [vmem:[%s0 + $0xb] sm:$0x1]
        %v188 = vld [vmem:[%s0 + $0xc] sm:$0x1]
        %v189 = vld [vmem:[%s0 + $0xd] sm:$0x1]
        %v190 = vld [vmem:[%s0 + $0xe] sm:$0x1]
        %v191 = vld [vmem:[%s0 + $0xf] sm:$0x1]
        %v192 = vld [vmem:[%s0 + $0x10] sm:$0x1]
        %v193 = vld [vmem:[%s0 + $0x11] sm:$0x1]
        %v194 = vld [vmem:[%s0 + $0x12] sm:$0x1]
        %v195 = vld [vmem:[%s0 + $0x13] sm:$0x1]
        %v196 = vld [vmem:[%s0 + $0x14] sm:$0x1]
        %v197 = vld [vmem:[%s0 + $0x15] sm:$0x1]
        %v198 = vld [vmem:[%s0 + $0x16] sm:$0x1]
        %v199 = vld [vmem:[%s0 + $0x17] sm:$0x1]
        %v200 = vld [vmem:[%s0 + $0x18] sm:$0x1]
        %v201 = vld [vmem:[%s0 + $0x19] sm:$0x1]
        %v202 = vld [vmem:[%s0 + $0x1a] sm:$0x1]
        %v203 = vld [vmem:[%s0 + $0x1b] sm:$0x1]
        %v204 = vld [vmem:[%s0 + $0x1c] sm:$0x1]
        %v205 = vld [vmem:[%s0 + $0x1d] sm:$0x1]
        %v206 = vld [vmem:[%s0 + $0x1e] sm:$0x1]
        %v207 = vld [vmem:[%s0 + $0x1f] sm:$0x1]
        %v240 = vlaneseq
        %v241 = vshrl.u32 %v240, 7
        %v242 = vsub.s32 0, %v241
        %v243 = vrot.slane %v176, %v242
        %v244 = vlaneseq
        %v245 = vshrl.u32 %v244, 7
        %v246 = vsub.s32 0, %v245
        %v247 = vrot.slane %v177, %v246
        %v248 = vlaneseq
        %v249 = vshrl.u32 %v248, 7
        %v250 = vsub.s32 0, %v249
        %v251 = vrot.slane %v178, %v250
        %v252 = vlaneseq
        %v253 = vshrl.u32 %v252, 7
        %v254 = vsub.s32 0, %v253
        %v255 = vrot.slane %v179, %v254
        %v256 = vlaneseq
        %v257 = vshrl.u32 %v256, 7
        %v258 = vsub.s32 0, %v257
        %v259 = vrot.slane %v180, %v258
        %v260 = vlaneseq
        %v261 = vshrl.u32 %v260, 7
        %v262 = vsub.s32 0, %v261
        %v263 = vrot.slane %v181, %v262
        %v264 = vlaneseq
        %v265 = vshrl.u32 %v264, 7
        %v266 = vsub.s32 0, %v265
        %v267 = vrot.slane %v182, %v266
        %v268 = vlaneseq
        %v269 = vshrl.u32 %v268, 7
        %v270 = vsub.s32 0, %v269
        %v271 = vrot.slane %v183, %v270
        %v272 = vlaneseq
        %v273 = vshrl.u32 %v272, 7
        %v274 = vsub.s32 0, %v273
        %v275 = vrot.slane %v184, %v274
        %v276 = vlaneseq
        %v277 = vshrl.u32 %v276, 7
        %v278 = vsub.s32 0, %v277
        %v279 = vrot.slane %v185, %v278
        %v280 = vlaneseq
        %v281 = vshrl.u32 %v280, 7
        %v282 = vsub.s32 0, %v281
        %v283 = vrot.slane %v186, %v282
        %v284 = vlaneseq
        %v285 = vshrl.u32 %v284, 7
        %v286 = vsub.s32 0, %v285
        %v287 = vrot.slane %v187, %v286
        %v288 = vlaneseq
        %v289 = vshrl.u32 %v288, 7
        %v290 = vsub.s32 0, %v289
        %v291 = vrot.slane %v188, %v290
        %v292 = vlaneseq
        %v293 = vshrl.u32 %v292, 7
        %v294 = vsub.s32 0, %v293
        %v295 = vrot.slane %v189, %v294
        %v296 = vlaneseq
        %v297 = vshrl.u32 %v296, 7
        %v298 = vsub.s32 0, %v297
        %v299 = vrot.slane %v190, %v298
        %v300 = vlaneseq
        %v301 = vshrl.u32 %v300, 7
        %v302 = vsub.s32 0, %v301
        %v303 = vrot.slane %v191, %v302
        %v304 = vlaneseq
        %v305 = vshrl.u32 %v304, 7
        %v306 = vsub.s32 0, %v305
        %v307 = vrot.slane %v192, %v306
        %v308 = vlaneseq
        %v309 = vshrl.u32 %v308, 7
        %v310 = vsub.s32 0, %v309
        %v311 = vrot.slane %v193, %v310
        %v312 = vlaneseq
        %v313 = vshrl.u32 %v312, 7
        %v314 = vsub.s32 0, %v313
        %v315 = vrot.slane %v194, %v314
        %v316 = vlaneseq
        %v317 = vshrl.u32 %v316, 7
        %v318 = vsub.s32 0, %v317
        %v319 = vrot.slane %v195, %v318
        %v320 = vlaneseq
        %v321 = vshrl.u32 %v320, 7
        %v322 = vsub.s32 0, %v321
        %v323 = vrot.slane %v196, %v322
        %v324 = vlaneseq
        %v325 = vshrl.u32 %v324, 7
        %v326 = vsub.s32 0, %v325
        %v327 = vrot.slane %v197, %v326
        %v328 = vlaneseq
        %v329 = vshrl.u32 %v328, 7
        %v330 = vsub.s32 0, %v329
        %v331 = vrot.slane %v198, %v330
        %v332 = vlaneseq
        %v333 = vshrl.u32 %v332, 7
        %v334 = vsub.s32 0, %v333
        %v335 = vrot.slane %v199, %v334
        %v336 = vlaneseq
        %v337 = vshrl.u32 %v336, 7
        %v338 = vsub.s32 0, %v337
        %v339 = vrot.slane %v200, %v338
        %v340 = vlaneseq
        %v341 = vshrl.u32 %v340, 7
        %v342 = vsub.s32 0, %v341
        %v343 = vrot.slane %v201, %v342
        %v344 = vlaneseq
        %v345 = vshrl.u32 %v344, 7
        %v346 = vsub.s32 0, %v345
        %v347 = vrot.slane %v202, %v346
        %v348 = vlaneseq
        %v349 = vshrl.u32 %v348, 7
        %v350 = vsub.s32 0, %v349
        %v351 = vrot.slane %v203, %v350
        %v352 = vlaneseq
        %v353 = vshrl.u32 %v352, 7
        %v354 = vsub.s32 0, %v353
        %v355 = vrot.slane %v204, %v354
        %v356 = vlaneseq
        %v357 = vshrl.u32 %v356, 7
        %v358 = vsub.s32 0, %v357
        %v359 = vrot.slane %v205, %v358
        %v360 = vlaneseq
        %v361 = vshrl.u32 %v360, 7
        %v362 = vsub.s32 0, %v361
        %v363 = vrot.slane %v206, %v362
        %v364 = vlaneseq
        %v365 = vshrl.u32 %v364, 7
        %v366 = vsub.s32 0, %v365
        %v367 = vrot.slane %v207, %v366
        %vm400 = vcmask 130048
        %401 = vst.msk [vmem:[%s169] sm:$0xff] %vm400, %v243
        %402 = vst.msk [vmem:[%s169 + $0x8] sm:$0xff] %vm400, %v243
        %403 = vst.msk [vmem:[%s169 + $0x10] sm:$0xff] %vm400, %v247
        %404 = vst.msk [vmem:[%s169 + $0x18] sm:$0xff] %vm400, %v247
        %405 = vst.msk [vmem:[%s169 + $0x20] sm:$0xff] %vm400, %v251
        %406 = vst.msk [vmem:[%s169 + $0x28] sm:$0xff] %vm400, %v251
        %407 = vst.msk [vmem:[%s169 + $0x30] sm:$0xff] %vm400, %v255
        %408 = vst.msk [vmem:[%s169 + $0x38] sm:$0xff] %vm400, %v255
        %409 = vst.msk [vmem:[%s169 + $0x40] sm:$0xff] %vm400, %v259
        %410 = vst.msk [vmem:[%s169 + $0x48] sm:$0xff] %vm400, %v259
        %411 = vst.msk [vmem:[%s169 + $0x50] sm:$0xff] %vm400, %v263
        %412 = vst.msk [vmem:[%s169 + $0x58] sm:$0xff] %vm400, %v263
        %413 = vst.msk [vmem:[%s169 + $0x60] sm:$0xff] %vm400, %v267
        %414 = vst.msk [vmem:[%s169 + $0x68] sm:$0xff] %vm400, %v267
        %415 = vst.msk [vmem:[%s169 + $0x70] sm:$0xff] %vm400, %v271
        %416 = vst.msk [vmem:[%s169 + $0x78] sm:$0xff] %vm400, %v271
        %417 = vst.msk [vmem:[%s169 + $0x80] sm:$0xff] %vm400, %v275
        %418 = vst.msk [vmem:[%s169 + $0x88] sm:$0xff] %vm400, %v275
        %419 = vst.msk [vmem:[%s169 + $0x90] sm:$0xff] %vm400, %v279
        %420 = vst.msk [vmem:[%s169 + $0x98] sm:$0xff] %vm400, %v279
        %421 = vst.msk [vmem:[%s169 + $0xa0] sm:$0xff] %vm400, %v283
        %422 = vst.msk [vmem:[%s169 + $0xa8] sm:$0xff] %vm400, %v283
        %423 = vst.msk [vmem:[%s169 + $0xb0] sm:$0xff] %vm400, %v287
        %424 = vst.msk [vmem:[%s169 + $0xb8] sm:$0xff] %vm400, %v287
        %425 = vst.msk [vmem:[%s169 + $0xc0] sm:$0xff] %vm400, %v291
        %426 = vst.msk [vmem:[%s169 + $0xc8] sm:$0xff] %vm400, %v291
        %427 = vst.msk [vmem:[%s169 + $0xd0] sm:$0xff] %vm400, %v295
        %428 = vst.msk [vmem:[%s169 + $0xd8] sm:$0xff] %vm400, %v295
        %429 = vst.msk [vmem:[%s169 + $0xe0] sm:$0xff] %vm400, %v299
        %430 = vst.msk [vmem:[%s169 + $0xe8] sm:$0xff] %vm400, %v299
        %431 = vst.msk [vmem:[%s169 + $0xf0] sm:$0xff] %vm400, %v303
        %432 = vst.msk [vmem:[%s169 + $0xf8] sm:$0xff] %vm400, %v303
        %433 = vst.msk [vmem:[%s169 + $0x100] sm:$0xff] %vm400, %v307
        %434 = vst.msk [vmem:[%s169 + $0x108] sm:$0xff] %vm400, %v307
        %435 = vst.msk [vmem:[%s169 + $0x110] sm:$0xff] %vm400, %v311
        %436 = vst.msk [vmem:[%s169 + $0x118] sm:$0xff] %vm400, %v311
        %437 = vst.msk [vmem:[%s169 + $0x120] sm:$0xff] %vm400, %v315
        %438 = vst.msk [vmem:[%s169 + $0x128] sm:$0xff] %vm400, %v315
        %439 = vst.msk [vmem:[%s169 + $0x130] sm:$0xff] %vm400, %v319
        %440 = vst.msk [vmem:[%s169 + $0x138] sm:$0xff] %vm400, %v319
        %441 = vst.msk [vmem:[%s169 + $0x140] sm:$0xff] %vm400, %v323
        %442 = vst.msk [vmem:[%s169 + $0x148] sm:$0xff] %vm400, %v323
        %443 = vst.msk [vmem:[%s169 + $0x150] sm:$0xff] %vm400, %v327
        %444 = vst.msk [vmem:[%s169 + $0x158] sm:$0xff] %vm400, %v327
        %445 = vst.msk [vmem:[%s169 + $0x160] sm:$0xff] %vm400, %v331
        %446 = vst.msk [vmem:[%s169 + $0x168] sm:$0xff] %vm400, %v331
        %447 = vst.msk [vmem:[%s169 + $0x170] sm:$0xff] %vm400, %v335
        %448 = vst.msk [vmem:[%s169 + $0x178] sm:$0xff] %vm400, %v335
        %449 = vst.msk [vmem:[%s169 + $0x180] sm:$0xff] %vm400, %v339
        %450 = vst.msk [vmem:[%s169 + $0x188] sm:$0xff] %vm400, %v339
        %451 = vst.msk [vmem:[%s169 + $0x190] sm:$0xff] %vm400, %v343
        %452 = vst.msk [vmem:[%s169 + $0x198] sm:$0xff] %vm400, %v343
        %453 = vst.msk [vmem:[%s169 + $0x1a0] sm:$0xff] %vm400, %v347
        %454 = vst.msk [vmem:[%s169 + $0x1a8] sm:$0xff] %vm400, %v347
        %455 = vst.msk [vmem:[%s169 + $0x1b0] sm:$0xff] %vm400, %v351
        %456 = vst.msk [vmem:[%s169 + $0x1b8] sm:$0xff] %vm400, %v351
        %457 = vst.msk [vmem:[%s169 + $0x1c0] sm:$0xff] %vm400, %v355
        %458 = vst.msk [vmem:[%s169 + $0x1c8] sm:$0xff] %vm400, %v355
        %459 = vst.msk [vmem:[%s169 + $0x1d0] sm:$0xff] %vm400, %v359
        %460 = vst.msk [vmem:[%s169 + $0x1d8] sm:$0xff] %vm400, %v359
        %461 = vst.msk [vmem:[%s169 + $0x1e0] sm:$0xff] %vm400, %v363
        %462 = vst.msk [vmem:[%s169 + $0x1e8] sm:$0xff] %vm400, %v363
        %463 = vst.msk [vmem:[%s169 + $0x1f0] sm:$0xff] %vm400, %v367
        %464 = vst.msk [vmem:[%s169 + $0x1f8] sm:$0xff] %vm400, %v367
      $region32: #{tpu_custom_call.1} parent=27 // pred_fallthru
        _
      %p465 = scmp.eq.s32.totalorder %s17, 1
      // Predicated region
      $region33: #{tpu_custom_call.1} parent=27 // pred_check
        %p466 = pneg %p465
      $region34: #{tpu_custom_call.1} parent=27 // pred_check_branch
        %468 = sbr.rel (%p466) target = $region36
      $region35: #{tpu_custom_call.1} parent=27 // pred_region
        %v469 = vld [vmem:[%s158] sm:$0xff]
        %v470 = vld [vmem:[%s158 + $0x8] sm:$0xff]
        %v471 = vld [vmem:[%s158 + $0x10] sm:$0xff]
        %v472 = vld [vmem:[%s158 + $0x18] sm:$0xff]
        %v473 = vld [vmem:[%s158 + $0x20] sm:$0xff]
        %v474 = vld [vmem:[%s158 + $0x28] sm:$0xff]
        %v475 = vld [vmem:[%s158 + $0x30] sm:$0xff]
        %v476 = vld [vmem:[%s158 + $0x38] sm:$0xff]
        %v477 = vld [vmem:[%s158 + $0x40] sm:$0xff]
        %v478 = vld [vmem:[%s158 + $0x48] sm:$0xff]
        %v479 = vld [vmem:[%s158 + $0x50] sm:$0xff]
        %v480 = vld [vmem:[%s158 + $0x58] sm:$0xff]
        %v481 = vld [vmem:[%s158 + $0x60] sm:$0xff]
        %v482 = vld [vmem:[%s158 + $0x68] sm:$0xff]
        %v483 = vld [vmem:[%s158 + $0x70] sm:$0xff]
        %v484 = vld [vmem:[%s158 + $0x78] sm:$0xff]
        %v485 = vld [vmem:[%s158 + $0x80] sm:$0xff]
        %v486 = vld [vmem:[%s158 + $0x88] sm:$0xff]
        %v487 = vld [vmem:[%s158 + $0x90] sm:$0xff]
        %v488 = vld [vmem:[%s158 + $0x98] sm:$0xff]
        %v489 = vld [vmem:[%s158 + $0xa0] sm:$0xff]
        %v490 = vld [vmem:[%s158 + $0xa8] sm:$0xff]
        %v491 = vld [vmem:[%s158 + $0xb0] sm:$0xff]
        %v492 = vld [vmem:[%s158 + $0xb8] sm:$0xff]
        %v493 = vld [vmem:[%s158 + $0xc0] sm:$0xff]
        %v494 = vld [vmem:[%s158 + $0xc8] sm:$0xff]
        %v495 = vld [vmem:[%s158 + $0xd0] sm:$0xff]
        %v496 = vld [vmem:[%s158 + $0xd8] sm:$0xff]
        %v497 = vld [vmem:[%s158 + $0xe0] sm:$0xff]
        %v498 = vld [vmem:[%s158 + $0xe8] sm:$0xff]
        %v499 = vld [vmem:[%s158 + $0xf0] sm:$0xff]
        %v500 = vld [vmem:[%s158 + $0xf8] sm:$0xff]
        %v501 = vld [vmem:[%s158 + $0x100] sm:$0xff]
        %v502 = vld [vmem:[%s158 + $0x108] sm:$0xff]
        %v503 = vld [vmem:[%s158 + $0x110] sm:$0xff]
        %v504 = vld [vmem:[%s158 + $0x118] sm:$0xff]
        %v505 = vld [vmem:[%s158 + $0x120] sm:$0xff]
        %v506 = vld [vmem:[%s158 + $0x128] sm:$0xff]
        %v507 = vld [vmem:[%s158 + $0x130] sm:$0xff]
        %v508 = vld [vmem:[%s158 + $0x138] sm:$0xff]
        %v509 = vld [vmem:[%s158 + $0x140] sm:$0xff]
        %v510 = vld [vmem:[%s158 + $0x148] sm:$0xff]
        %v511 = vld [vmem:[%s158 + $0x150] sm:$0xff]
        %v512 = vld [vmem:[%s158 + $0x158] sm:$0xff]
        %v513 = vld [vmem:[%s158 + $0x160] sm:$0xff]
        %v514 = vld [vmem:[%s158 + $0x168] sm:$0xff]
        %v515 = vld [vmem:[%s158 + $0x170] sm:$0xff]
        %v516 = vld [vmem:[%s158 + $0x178] sm:$0xff]
        %v517 = vld [vmem:[%s158 + $0x180] sm:$0xff]
        %v518 = vld [vmem:[%s158 + $0x188] sm:$0xff]
        %v519 = vld [vmem:[%s158 + $0x190] sm:$0xff]
        %v520 = vld [vmem:[%s158 + $0x198] sm:$0xff]
        %v521 = vld [vmem:[%s158 + $0x1a0] sm:$0xff]
        %v522 = vld [vmem:[%s158 + $0x1a8] sm:$0xff]
        %v523 = vld [vmem:[%s158 + $0x1b0] sm:$0xff]
        %v524 = vld [vmem:[%s158 + $0x1b8] sm:$0xff]
        %v525 = vld [vmem:[%s158 + $0x1c0] sm:$0xff]
        %v526 = vld [vmem:[%s158 + $0x1c8] sm:$0xff]
        %v527 = vld [vmem:[%s158 + $0x1d0] sm:$0xff]
        %v528 = vld [vmem:[%s158 + $0x1d8] sm:$0xff]
        %v529 = vld [vmem:[%s158 + $0x1e0] sm:$0xff]
        %v530 = vld [vmem:[%s158 + $0x1e8] sm:$0xff]
        %v531 = vld [vmem:[%s158 + $0x1f0] sm:$0xff]
        %v532 = vld [vmem:[%s158 + $0x1f8] sm:$0xff]
        %534 = vset.pattern.permute.xlu0 0
        %535 = vperm.xlu0 %534, %v469
        %v536 = vpop.permute.xlu0 %535
        %539 = vset.pattern.permute.xlu0 0
        %540 = vperm.xlu0 %539, %v470
        %v541 = vpop.permute.xlu0 %540
        %544 = vset.pattern.permute.xlu0 0
        %545 = vperm.xlu0 %544, %v471
        %v546 = vpop.permute.xlu0 %545
        %549 = vset.pattern.permute.xlu0 0
        %550 = vperm.xlu0 %549, %v472
        %v551 = vpop.permute.xlu0 %550
        %554 = vset.pattern.permute.xlu0 0
        %555 = vperm.xlu0 %554, %v473
        %v556 = vpop.permute.xlu0 %555
        %559 = vset.pattern.permute.xlu0 0
        %560 = vperm.xlu0 %559, %v474
        %v561 = vpop.permute.xlu0 %560
        %564 = vset.pattern.permute.xlu0 0
        %565 = vperm.xlu0 %564, %v475
        %v566 = vpop.permute.xlu0 %565
        %569 = vset.pattern.permute.xlu0 0
        %570 = vperm.xlu0 %569, %v476
        %v571 = vpop.permute.xlu0 %570
        %574 = vset.pattern.permute.xlu0 0
        %575 = vperm.xlu0 %574, %v477
        %v576 = vpop.permute.xlu0 %575
        %579 = vset.pattern.permute.xlu0 0
        %580 = vperm.xlu0 %579, %v478
        %v581 = vpop.permute.xlu0 %580
        %584 = vset.pattern.permute.xlu0 0
        %585 = vperm.xlu0 %584, %v479
        %v586 = vpop.permute.xlu0 %585
        %589 = vset.pattern.permute.xlu0 0
        %590 = vperm.xlu0 %589, %v480
        %v591 = vpop.permute.xlu0 %590
        %594 = vset.pattern.permute.xlu0 0
        %595 = vperm.xlu0 %594, %v481
        %v596 = vpop.permute.xlu0 %595
        %599 = vset.pattern.permute.xlu0 0
        %600 = vperm.xlu0 %599, %v482
        %v601 = vpop.permute.xlu0 %600
        %604 = vset.pattern.permute.xlu0 0
        %605 = vperm.xlu0 %604, %v483
        %v606 = vpop.permute.xlu0 %605
        %609 = vset.pattern.permute.xlu0 0
        %610 = vperm.xlu0 %609, %v484
        %v611 = vpop.permute.xlu0 %610
        %614 = vset.pattern.permute.xlu0 0
        %615 = vperm.xlu0 %614, %v485
        %v616 = vpop.permute.xlu0 %615
        %619 = vset.pattern.permute.xlu0 0
        %620 = vperm.xlu0 %619, %v486
        %v621 = vpop.permute.xlu0 %620
        %624 = vset.pattern.permute.xlu0 0
        %625 = vperm.xlu0 %624, %v487
        %v626 = vpop.permute.xlu0 %625
        %629 = vset.pattern.permute.xlu0 0
        %630 = vperm.xlu0 %629, %v488
        %v631 = vpop.permute.xlu0 %630
        %634 = vset.pattern.permute.xlu0 0
        %635 = vperm.xlu0 %634, %v489
        %v636 = vpop.permute.xlu0 %635
        %639 = vset.pattern.permute.xlu0 0
        %640 = vperm.xlu0 %639, %v490
        %v641 = vpop.permute.xlu0 %640
        %644 = vset.pattern.permute.xlu0 0
        %645 = vperm.xlu0 %644, %v491
        %v646 = vpop.permute.xlu0 %645
        %649 = vset.pattern.permute.xlu0 0
        %650 = vperm.xlu0 %649, %v492
        %v651 = vpop.permute.xlu0 %650
        %654 = vset.pattern.permute.xlu0 0
        %655 = vperm.xlu0 %654, %v493
        %v656 = vpop.permute.xlu0 %655
        %659 = vset.pattern.permute.xlu0 0
        %660 = vperm.xlu0 %659, %v494
        %v661 = vpop.permute.xlu0 %660
        %664 = vset.pattern.permute.xlu0 0
        %665 = vperm.xlu0 %664, %v495
        %v666 = vpop.permute.xlu0 %665
        %669 = vset.pattern.permute.xlu0 0
        %670 = vperm.xlu0 %669, %v496
        %v671 = vpop.permute.xlu0 %670
        %674 = vset.pattern.permute.xlu0 0
        %675 = vperm.xlu0 %674, %v497
        %v676 = vpop.permute.xlu0 %675
        %679 = vset.pattern.permute.xlu0 0
        %680 = vperm.xlu0 %679, %v498
        %v681 = vpop.permute.xlu0 %680
        %684 = vset.pattern.permute.xlu0 0
        %685 = vperm.xlu0 %684, %v499
        %v686 = vpop.permute.xlu0 %685
        %689 = vset.pattern.permute.xlu0 0
        %690 = vperm.xlu0 %689, %v500
        %v691 = vpop.permute.xlu0 %690
        %694 = vset.pattern.permute.xlu0 0
        %695 = vperm.xlu0 %694, %v501
        %v696 = vpop.permute.xlu0 %695
        %699 = vset.pattern.permute.xlu0 0
        %700 = vperm.xlu0 %699, %v502
        %v701 = vpop.permute.xlu0 %700
        %704 = vset.pattern.permute.xlu0 0
        %705 = vperm.xlu0 %704, %v503
        %v706 = vpop.permute.xlu0 %705
        %709 = vset.pattern.permute.xlu0 0
        %710 = vperm.xlu0 %709, %v504
        %v711 = vpop.permute.xlu0 %710
        %714 = vset.pattern.permute.xlu0 0
        %715 = vperm.xlu0 %714, %v505
        %v716 = vpop.permute.xlu0 %715
        %719 = vset.pattern.permute.xlu0 0
        %720 = vperm.xlu0 %719, %v506
        %v721 = vpop.permute.xlu0 %720
        %724 = vset.pattern.permute.xlu0 0
        %725 = vperm.xlu0 %724, %v507
        %v726 = vpop.permute.xlu0 %725
        %729 = vset.pattern.permute.xlu0 0
        %730 = vperm.xlu0 %729, %v508
        %v731 = vpop.permute.xlu0 %730
        %734 = vset.pattern.permute.xlu0 0
        %735 = vperm.xlu0 %734, %v509
        %v736 = vpop.permute.xlu0 %735
        %739 = vset.pattern.permute.xlu0 0
        %740 = vperm.xlu0 %739, %v510
        %v741 = vpop.permute.xlu0 %740
        %744 = vset.pattern.permute.xlu0 0
        %745 = vperm.xlu0 %744, %v511
        %v746 = vpop.permute.xlu0 %745
        %749 = vset.pattern.permute.xlu0 0
        %750 = vperm.xlu0 %749, %v512
        %v751 = vpop.permute.xlu0 %750
        %754 = vset.pattern.permute.xlu0 0
        %755 = vperm.xlu0 %754, %v513
        %v756 = vpop.permute.xlu0 %755
        %759 = vset.pattern.permute.xlu0 0
        %760 = vperm.xlu0 %759, %v514
        %v761 = vpop.permute.xlu0 %760
        %764 = vset.pattern.permute.xlu0 0
        %765 = vperm.xlu0 %764, %v515
        %v766 = vpop.permute.xlu0 %765
        %769 = vset.pattern.permute.xlu0 0
        %770 = vperm.xlu0 %769, %v516
        %v771 = vpop.permute.xlu0 %770
        %774 = vset.pattern.permute.xlu0 0
        %775 = vperm.xlu0 %774, %v517
        %v776 = vpop.permute.xlu0 %775
        %779 = vset.pattern.permute.xlu0 0
        %780 = vperm.xlu0 %779, %v518
        %v781 = vpop.permute.xlu0 %780
        %784 = vset.pattern.permute.xlu0 0
        %785 = vperm.xlu0 %784, %v519
        %v786 = vpop.permute.xlu0 %785
        %789 = vset.pattern.permute.xlu0 0
        %790 = vperm.xlu0 %789, %v520
        %v791 = vpop.permute.xlu0 %790
        %794 = vset.pattern.permute.xlu0 0
        %795 = vperm.xlu0 %794, %v521
        %v796 = vpop.permute.xlu0 %795
        %799 = vset.pattern.permute.xlu0 0
        %800 = vperm.xlu0 %799, %v522
        %v801 = vpop.permute.xlu0 %800
        %804 = vset.pattern.permute.xlu0 0
        %805 = vperm.xlu0 %804, %v523
        %v806 = vpop.permute.xlu0 %805
        %809 = vset.pattern.permute.xlu0 0
        %810 = vperm.xlu0 %809, %v524
        %v811 = vpop.permute.xlu0 %810
        %814 = vset.pattern.permute.xlu0 0
        %815 = vperm.xlu0 %814, %v525
        %v816 = vpop.permute.xlu0 %815
        %819 = vset.pattern.permute.xlu0 0
        %820 = vperm.xlu0 %819, %v526
        %v821 = vpop.permute.xlu0 %820
        %824 = vset.pattern.permute.xlu0 0
        %825 = vperm.xlu0 %824, %v527
        %v826 = vpop.permute.xlu0 %825
        %829 = vset.pattern.permute.xlu0 0
        %830 = vperm.xlu0 %829, %v528
        %v831 = vpop.permute.xlu0 %830
        %834 = vset.pattern.permute.xlu0 0
        %835 = vperm.xlu0 %834, %v529
        %v836 = vpop.permute.xlu0 %835
        %839 = vset.pattern.permute.xlu0 0
        %840 = vperm.xlu0 %839, %v530
        %v841 = vpop.permute.xlu0 %840
        %844 = vset.pattern.permute.xlu0 0
        %845 = vperm.xlu0 %844, %v531
        %v846 = vpop.permute.xlu0 %845
        %849 = vset.pattern.permute.xlu0 0
        %850 = vperm.xlu0 %849, %v532
        %v851 = vpop.permute.xlu0 %850
        %vm853 = vcmask 130048
        %854 = vst.msk [vmem:[%s169] sm:$0xff] %vm853, %v536
        %855 = vst.msk [vmem:[%s169 + $0x8] sm:$0xff] %vm853, %v541
        %856 = vst.msk [vmem:[%s169 + $0x10] sm:$0xff] %vm853, %v546
        %857 = vst.msk [vmem:[%s169 + $0x18] sm:$0xff] %vm853, %v551
        %858 = vst.msk [vmem:[%s169 + $0x20] sm:$0xff] %vm853, %v556
        %859 = vst.msk [vmem:[%s169 + $0x28] sm:$0xff] %vm853, %v561
        %860 = vst.msk [vmem:[%s169 + $0x30] sm:$0xff] %vm853, %v566
        %861 = vst.msk [vmem:[%s169 + $0x38] sm:$0xff] %vm853, %v571
        %862 = vst.msk [vmem:[%s169 + $0x40] sm:$0xff] %vm853, %v576
        %863 = vst.msk [vmem:[%s169 + $0x48] sm:$0xff] %vm853, %v581
        %864 = vst.msk [vmem:[%s169 + $0x50] sm:$0xff] %vm853, %v586
        %865 = vst.msk [vmem:[%s169 + $0x58] sm:$0xff] %vm853, %v591
        %866 = vst.msk [vmem:[%s169 + $0x60] sm:$0xff] %vm853, %v596
        %867 = vst.msk [vmem:[%s169 + $0x68] sm:$0xff] %vm853, %v601
        %868 = vst.msk [vmem:[%s169 + $0x70] sm:$0xff] %vm853, %v606
        %869 = vst.msk [vmem:[%s169 + $0x78] sm:$0xff] %vm853, %v611
        %870 = vst.msk [vmem:[%s169 + $0x80] sm:$0xff] %vm853, %v616
        %871 = vst.msk [vmem:[%s169 + $0x88] sm:$0xff] %vm853, %v621
        %872 = vst.msk [vmem:[%s169 + $0x90] sm:$0xff] %vm853, %v626
        %873 = vst.msk [vmem:[%s169 + $0x98] sm:$0xff] %vm853, %v631
        %874 = vst.msk [vmem:[%s169 + $0xa0] sm:$0xff] %vm853, %v636
        %875 = vst.msk [vmem:[%s169 + $0xa8] sm:$0xff] %vm853, %v641
        %876 = vst.msk [vmem:[%s169 + $0xb0] sm:$0xff] %vm853, %v646
        %877 = vst.msk [vmem:[%s169 + $0xb8] sm:$0xff] %vm853, %v651
        %878 = vst.msk [vmem:[%s169 + $0xc0] sm:$0xff] %vm853, %v656
        %879 = vst.msk [vmem:[%s169 + $0xc8] sm:$0xff] %vm853, %v661
        %880 = vst.msk [vmem:[%s169 + $0xd0] sm:$0xff] %vm853, %v666
        %881 = vst.msk [vmem:[%s169 + $0xd8] sm:$0xff] %vm853, %v671
        %882 = vst.msk [vmem:[%s169 + $0xe0] sm:$0xff] %vm853, %v676
        %883 = vst.msk [vmem:[%s169 + $0xe8] sm:$0xff] %vm853, %v681
        %884 = vst.msk [vmem:[%s169 + $0xf0] sm:$0xff] %vm853, %v686
        %885 = vst.msk [vmem:[%s169 + $0xf8] sm:$0xff] %vm853, %v691
        %886 = vst.msk [vmem:[%s169 + $0x100] sm:$0xff] %vm853, %v696
        %887 = vst.msk [vmem:[%s169 + $0x108] sm:$0xff] %vm853, %v701
        %888 = vst.msk [vmem:[%s169 + $0x110] sm:$0xff] %vm853, %v706
        %889 = vst.msk [vmem:[%s169 + $0x118] sm:$0xff] %vm853, %v711
        %890 = vst.msk [vmem:[%s169 + $0x120] sm:$0xff] %vm853, %v716
        %891 = vst.msk [vmem:[%s169 + $0x128] sm:$0xff] %vm853, %v721
        %892 = vst.msk [vmem:[%s169 + $0x130] sm:$0xff] %vm853, %v726
        %893 = vst.msk [vmem:[%s169 + $0x138] sm:$0xff] %vm853, %v731
        %894 = vst.msk [vmem:[%s169 + $0x140] sm:$0xff] %vm853, %v736
        %895 = vst.msk [vmem:[%s169 + $0x148] sm:$0xff] %vm853, %v741
        %896 = vst.msk [vmem:[%s169 + $0x150] sm:$0xff] %vm853, %v746
        %897 = vst.msk [vmem:[%s169 + $0x158] sm:$0xff] %vm853, %v751
        %898 = vst.msk [vmem:[%s169 + $0x160] sm:$0xff] %vm853, %v756
        %899 = vst.msk [vmem:[%s169 + $0x168] sm:$0xff] %vm853, %v761
        %900 = vst.msk [vmem:[%s169 + $0x170] sm:$0xff] %vm853, %v766
        %901 = vst.msk [vmem:[%s169 + $0x178] sm:$0xff] %vm853, %v771
        %902 = vst.msk [vmem:[%s169 + $0x180] sm:$0xff] %vm853, %v776
        %903 = vst.msk [vmem:[%s169 + $0x188] sm:$0xff] %vm853, %v781
        %904 = vst.msk [vmem:[%s169 + $0x190] sm:$0xff] %vm853, %v786
        %905 = vst.msk [vmem:[%s169 + $0x198] sm:$0xff] %vm853, %v791
        %906 = vst.msk [vmem:[%s169 + $0x1a0] sm:$0xff] %vm853, %v796
        %907 = vst.msk [vmem:[%s169 + $0x1a8] sm:$0xff] %vm853, %v801
        %908 = vst.msk [vmem:[%s169 + $0x1b0] sm:$0xff] %vm853, %v806
        %909 = vst.msk [vmem:[%s169 + $0x1b8] sm:$0xff] %vm853, %v811
        %910 = vst.msk [vmem:[%s169 + $0x1c0] sm:$0xff] %vm853, %v816
        %911 = vst.msk [vmem:[%s169 + $0x1c8] sm:$0xff] %vm853, %v821
        %912 = vst.msk [vmem:[%s169 + $0x1d0] sm:$0xff] %vm853, %v826
        %913 = vst.msk [vmem:[%s169 + $0x1d8] sm:$0xff] %vm853, %v831
        %914 = vst.msk [vmem:[%s169 + $0x1e0] sm:$0xff] %vm853, %v836
        %915 = vst.msk [vmem:[%s169 + $0x1e8] sm:$0xff] %vm853, %v841
        %916 = vst.msk [vmem:[%s169 + $0x1f0] sm:$0xff] %vm853, %v846
        %917 = vst.msk [vmem:[%s169 + $0x1f8] sm:$0xff] %vm853, %v851
      $region36: #{tpu_custom_call.1} parent=27 // pred_fallthru
        _
      %s918 = smul.u32 32, %s17
      %s919 = smul.u32 2, %s18
      %p920 = scmp.lt.s32.totalorder %s918, 63
      %s921 = scalar_select %p920, %s918, 63
      %p922 = scmp.lt.s32.totalorder %s919, 1
      %s923 = scalar_select %p922, %s919, 1
      %s924 = smul.addr %s921, 2
      %s925 = sadd.s32 %s923, %s924
      %s926 = smul.addr %s925, 8
      %s927 = scalar_lea.vmem %s2, %s926
      // Predicated region
      $region37: #{tpu_custom_call.1} parent=27 // pred_check
        %p928 = pneg %p92
      $region38: #{tpu_custom_call.1} parent=27 // pred_check_branch
        %930 = sbr.rel (%p928) target = $region40
      $region39: #{tpu_custom_call.1} parent=27 // pred_region
        %s931 = smul.u32 32, %s17
        %s932 = smul.u32 2, %s18
      $region40: #{tpu_custom_call.1} parent=27 // pred_fallthru
        _
    $region28: #{tpu_custom_call.1} parent=5 // pred_fallthru
      _
    %p933 = scmp.le.s32.totalorder 2, %s8
    // Predicated region
    $region41: #{tpu_custom_call.1} parent=5 // pred_check
      %p934 = pneg %p933
    $region42: #{tpu_custom_call.1} parent=5 // pred_check_branch
      %936 = sbr.rel (%p934) target = $region44
    $region43: #{tpu_custom_call.1} parent=5 // pred_region
      %s937 = ssub.s32 %s8, 2
      // Predicated region
      $region45: #{tpu_custom_call.1} parent=43 // pred_check
        %p938 = pneg %p98
      $region46: #{tpu_custom_call.1} parent=43 // pred_check_branch
        %940 = sbr.rel (%p938) target = $region48
      $region47: #{tpu_custom_call.1} parent=43 // pred_region
        %s941 = smul.u32 32, %s19
        %s942 = smul.u32 2, %s20
        %p943 = scmp.lt.s32.totalorder %s941, 63
        %s944 = scalar_select %p943, %s941, 63
        %p945 = scmp.lt.s32.totalorder %s942, 1
        %s946 = scalar_select %p945, %s942, 1
        %s947 = smul.addr %s944, 2
        %s948 = sadd.s32 %s946, %s947
        %s949 = smul.addr %s948, 8
        %s950 = scalar_lea.vmem %s2, %s949
      $region48: #{tpu_custom_call.1} parent=43 // pred_fallthru
        _
    $region44: #{tpu_custom_call.1} parent=5 // pred_fallthru
      _
  $region6: #{tpu_custom_call.1} parent=0 // loop_footer
    %s12 = sadd.s32 1, %s8
  $region7: #{tpu_custom_call.1} parent=0 // loop_footer_branch
    %7 = sbr.rel target = $region3
  $region8: #{tpu_custom_call.1} parent=0 // loop_exit
    _

</llo_original>
